<compile_context>
chip_gen: v7x
topology: tpu7x:2x2x1
jax: 0.10.0
libtpu: 0.0.40
codegen_flags: <defaults>
</compile_context>

<pallas_src>
import functools
import math

import jax
import jax.numpy as jnp
from jax.experimental import pallas as pl
from jax.experimental.pallas import tpu as pltpu


def attention_kernel(x_ref, w_ref, b_ref, w0_ref, g0_ref, v_ref, *, tb, n, dk, h):
    # x_ref: (TB*N, H) flattened batch tile of obs_embed.
    x = x_ref[...]                                                     # (TB*N, H)

    # Fused QKV projection: one MXU matmul, 2*dk+H output lanes.
    qkv = jnp.dot(x, w_ref[...], preferred_element_type=jnp.float32) + b_ref[...]

    # Value projection goes straight back out as a flat slab (no relayout).
    v_ref[...] = qkv[:, 2 * dk:]                                       # (TB*N, H)

    # Re-group per batch element (leading-dim split; layout-preserving).
    qkv3 = qkv.reshape(tb, n, 2 * dk + h)                              # (TB, N, 2dk+H)
    q0 = qkv3[:, 0:1, :dk]                                             # (TB, 1, dk)  row-0 query (pre-scaled)
    k3 = qkv3[:, :, dk:2 * dk]                                         # (TB, N, dk)
    v3 = qkv3[:, :, 2 * dk:]                                           # (TB, N, H)

    # Row-0 attention scores: reduce over dk on the VPU/XLU.
    s = jnp.sum(q0 * k3, axis=-1, keepdims=True)                       # (TB, N, 1)

    # Numerically stable softmax over the N (agent) axis; reciprocal on EUP.
    m = jnp.max(s, axis=1, keepdims=True)                              # (TB, 1, 1)
    e = jnp.exp(s - m)                                                 # (TB, N, 1)
    l = jnp.sum(e, axis=1, keepdims=True)                              # (TB, 1, 1)
    w = e * pl.reciprocal(l, approx=True)                              # (TB, N, 1)

    w0_ref[...] = w                                                    # weights for row 0
    g0_ref[...] = jnp.sum(w * v3, axis=1, keepdims=True)               # (TB, 1, H)


def attention_base_forward(obs_embed, params, dk, block_b=256):
    """obs_embed: [B, N, H] float32.  Returns (weight[:,0,:], weighted_gf[:,0,:], value)."""
    B, N, H = obs_embed.shape
    wq, bq, wk, bk, wv, bv = params  # wq,wk: (H, dk); wv: (H, H); biases: (1, out)

    # Fold the 1/sqrt(dk) score scale into the query projection, and fuse
    # Wq|Wk|Wv into a single (H, 2*dk+H) weight so the kernel does one matmul.
    scale = 1.0 / math.sqrt(dk)
    w_cat = jnp.concatenate([wq * scale, wk, wv], axis=1)              # (H, 2dk+H)
    b_cat = jnp.concatenate([bq * scale, bk, bv], axis=1)              # (1, 2dk+H)

    # Batch tiling: many batch elements per grid step (pad B if needed).
    if B <= block_b:
        tb = B
        b_pad = B
    else:
        tb = block_b                                   # multiple of 8
        b_pad = pl.cdiv(B, tb) * tb

    x2d = obs_embed.reshape(B * N, H)
    if b_pad != B:
        x2d = jnp.pad(x2d, ((0, (b_pad - B) * N), (0, 0)))

    kernel = functools.partial(attention_kernel, tb=tb, n=N, dk=dk, h=H)

    out_shapes = (
        jax.ShapeDtypeStruct((b_pad, N, 1), jnp.float32),   # row-0 weights
        jax.ShapeDtypeStruct((b_pad, 1, H), jnp.float32),   # row-0 weighted features
        jax.ShapeDtypeStruct((b_pad * N, H), jnp.float32),  # value, flat slab
    )

    grid_spec = pltpu.PrefetchScalarGridSpec(
        num_scalar_prefetch=0,
        grid=(b_pad // tb,),
        in_specs=[
            pl.BlockSpec((tb * N, H), lambda b: (b, 0)),           # obs tile (flattened)
            pl.BlockSpec((H, 2 * dk + H), lambda b: (0, 0)),       # fused QKV weight
            pl.BlockSpec((1, 2 * dk + H), lambda b: (0, 0)),       # fused bias
        ],
        out_specs=[
            pl.BlockSpec((tb, N, 1), lambda b: (b, 0, 0)),
            pl.BlockSpec((tb, 1, H), lambda b: (b, 0, 0)),
            pl.BlockSpec((tb * N, H), lambda b: (b, 0)),
        ],
    )

    w0p, g0p, v_flat = pl.pallas_call(
        kernel,
        out_shape=out_shapes,
        grid_spec=grid_spec,
        compiler_params=pltpu.CompilerParams(
            dimension_semantics=("parallel",),
            vmem_limit_bytes=32 * 1024 * 1024,  # generous headroom; ~1.5 MiB used per step at tb=256
        ),
    )(x2d, w_cat, b_cat)

    weight = w0p[:B, :, 0]                       # (B, N)
    weighted_gf = g0p[:B, 0, :]                  # (B, H)
    value = v_flat[: B * N].reshape(B, N, H)     # (B, N, H)
    return weight, weighted_gf, value


def init_params(key, hidden_dim, dk):
    """Deterministic init mimicking nn.Linear (uniform +-1/sqrt(fan_in)).
    Weights stored as (in, out) so the kernel does x @ W + b."""
    ks = jax.random.split(key, 6)
    bound_h = 1.0 / math.sqrt(hidden_dim)
    wq = jax.random.uniform(ks[0], (hidden_dim, dk), jnp.float32, -bound_h, bound_h)
    bq = jax.random.uniform(ks[1], (1, dk), jnp.float32, -bound_h, bound_h)
    wk = jax.random.uniform(ks[2], (hidden_dim, dk), jnp.float32, -bound_h, bound_h)
    bk = jax.random.uniform(ks[3], (1, dk), jnp.float32, -bound_h, bound_h)
    wv = jax.random.uniform(ks[4], (hidden_dim, hidden_dim), jnp.float32, -bound_h, bound_h)
    bv = jax.random.uniform(ks[5], (1, hidden_dim), jnp.float32, -bound_h, bound_h)
    return (wq, bq, wk, bk, wv, bv)


def reference_forward(obs_embed, params, dk):
    wq, bq, wk, bk, wv, bv = params
    q = obs_embed @ wq + bq[0]
    k = obs_embed @ wk + bk[0]
    v = obs_embed @ wv + bv[0]
    s = jnp.einsum("bnd,bmd->bnm", q, k) / math.sqrt(dk)
    w = jax.nn.softmax(s, axis=2)
    g = jnp.einsum("bnm,bmh->bnh", w, v)
    return w[:, 0, :], g[:, 0, :], v


if __name__ == "__main__":
    B, N, H, DK = 2, 8, 32, 16   # batch, agents/seq, hidden_dim, dk

    key = jax.random.PRNGKey(0)
    k_x, k_p = jax.random.split(key)
    obs_embed = jax.random.normal(k_x, (B, N, H), dtype=jnp.float32)
    params = init_params(k_p, H, DK)

    w0, g0, value = attention_base_forward(obs_embed, params, DK)
    jax.block_until_ready((w0, g0, value))

    # sanity check against pure-JAX reference (tolerance covers the EUP
    # approximate reciprocal used for the softmax normalization)
    rw0, rg0, rv = reference_forward(obs_embed, params, DK)
    assert jnp.allclose(w0, rw0, atol=2e-3, rtol=2e-3), "weight mismatch"
    assert jnp.allclose(g0, rg0, atol=2e-3, rtol=2e-3), "weighted_gf mismatch"
    assert jnp.allclose(value, rv, atol=1e-5, rtol=1e-5), "value mismatch"

    print("KERNEL_OK")
</pallas_src>

<mosaic_0001>
module attributes {stable_mosaic.version = 11 : i64} {
  func.func @attention_kernel(%arg0: i32, %arg1: memref<16x32xf32, #tpu.memory_space<vmem>>, %arg2: memref<32x64xf32, #tpu.memory_space<vmem>>, %arg3: memref<1x64xf32, #tpu.memory_space<vmem>>, %arg4: memref<2x8x1xf32, #tpu.memory_space<vmem>>, %arg5: memref<2x1x32xf32, #tpu.memory_space<vmem>>, %arg6: memref<16x32xf32, #tpu.memory_space<vmem>>) attributes {dimension_semantics = [#tpu.dimension_semantics<parallel>], iteration_bounds = array<i64: 1>, scalar_prefetch = 0 : i64, scratch_operands = 0 : i64, tpu.core_type = #tpu.core_type<tc>, window_params = [{transform_indices = @transform_0, window_bounds = array<i64: 16, 32>}, {pipeline_mode = #tpu.pipeline_mode<synchronous>, transform_indices = @transform_1, window_bounds = array<i64: 32, 64>}, {pipeline_mode = #tpu.pipeline_mode<synchronous>, transform_indices = @transform_2, window_bounds = array<i64: 1, 64>}, {transform_indices = @transform_3, window_bounds = array<i64: 2, 8, 1>}, {transform_indices = @transform_4, window_bounds = array<i64: 2, 1, 32>}, {transform_indices = @transform_5, window_bounds = array<i64: 16, 32>}]} {
    %c0 = arith.constant 0 : index
    %c0_0 = arith.constant 0 : index
    %0 = vector.load %arg1[%c0, %c0_0] : memref<16x32xf32, #tpu.memory_space<vmem>>, vector<16x32xf32>
    %c0_1 = arith.constant 0 : index
    %c0_2 = arith.constant 0 : index
    %1 = vector.load %arg2[%c0_1, %c0_2] : memref<32x64xf32, #tpu.memory_space<vmem>>, vector<32x64xf32>
    %cst = arith.constant dense<0.000000e+00> : vector<16x64xf32>
    %2 = tpu.matmul %0, %1, %cst {dimension_numbers = #tpu.dot_dimension_numbers<[1], [0], [0], [1], [0, 0, 1, 1], [], []>} : vector<16x32xf32>, vector<32x64xf32>, vector<16x64xf32> -> vector<16x64xf32>
    %c0_3 = arith.constant 0 : index
    %c0_4 = arith.constant 0 : index
    %3 = vector.load %arg3[%c0_3, %c0_4] : memref<1x64xf32, #tpu.memory_space<vmem>>, vector<1x64xf32>
    %4 = vector.broadcast %3 : vector<1x64xf32> to vector<16x64xf32>
    %5 = arith.addf %2, %4 : vector<16x64xf32>
    %6 = vector.extract_strided_slice %5 {offsets = [0, 32], sizes = [16, 32], strides = [1, 1]} : vector<16x64xf32> to vector<16x32xf32>
    %c0_5 = arith.constant 0 : index
    %c0_6 = arith.constant 0 : index
    %7 = vector.load %arg6[%c0_5, %c0_6] : memref<16x32xf32, #tpu.memory_space<vmem>>, vector<16x32xf32>
    tpu.vector_store %arg6[%c0_5, %c0_6], %6 {strides = array<i32>} : memref<16x32xf32, #tpu.memory_space<vmem>>, vector<16x32xf32>,
    %8 = vector.shape_cast %5 : vector<16x64xf32> to vector<2x8x64xf32>
    %9 = vector.extract_strided_slice %8 {offsets = [0, 0, 0], sizes = [2, 1, 16], strides = [1, 1, 1]} : vector<2x8x64xf32> to vector<2x1x16xf32>
    %10 = vector.extract_strided_slice %8 {offsets = [0, 0, 16], sizes = [2, 8, 16], strides = [1, 1, 1]} : vector<2x8x64xf32> to vector<2x8x16xf32>
    %11 = vector.extract_strided_slice %8 {offsets = [0, 0, 32], sizes = [2, 8, 32], strides = [1, 1, 1]} : vector<2x8x64xf32> to vector<2x8x32xf32>
    %12 = vector.broadcast %9 : vector<2x1x16xf32> to vector<2x8x16xf32>
    %13 = arith.mulf %12, %10 : vector<2x8x16xf32>
    %cst_7 = arith.constant dense<0.000000e+00> : vector<2x8xf32>
    %14 = vector.multi_reduction <add>, %13, %cst_7 [2] : vector<2x8x16xf32> to vector<2x8xf32>
    %15 = vector.shape_cast %14 : vector<2x8xf32> to vector<2x8x1xf32>
    %cst_8 = arith.constant dense<0xFF800000> : vector<2x1xf32>
    %16 = vector.multi_reduction <maximumf>, %15, %cst_8 [1] : vector<2x8x1xf32> to vector<2x1xf32>
    %17 = vector.shape_cast %16 : vector<2x1xf32> to vector<2x1x1xf32>
    %18 = vector.broadcast %17 : vector<2x1x1xf32> to vector<2x8x1xf32>
    %19 = arith.subf %15, %18 : vector<2x8x1xf32>
    %20 = math.exp %19 : vector<2x8x1xf32>
    %cst_9 = arith.constant dense<0.000000e+00> : vector<2x1xf32>
    %21 = vector.multi_reduction <add>, %20, %cst_9 [1] : vector<2x8x1xf32> to vector<2x1xf32>
    %22 = vector.shape_cast %21 : vector<2x1xf32> to vector<2x1x1xf32>
    %23 = tpu.reciprocal %22 {approx = true} : vector<2x1x1xf32> -> vector<2x1x1xf32>
    %24 = vector.broadcast %23 : vector<2x1x1xf32> to vector<2x8x1xf32>
    %25 = arith.mulf %20, %24 : vector<2x8x1xf32>
    %c0_10 = arith.constant 0 : index
    %c0_11 = arith.constant 0 : index
    %c0_12 = arith.constant 0 : index
    %26 = vector.load %arg4[%c0_10, %c0_11, %c0_12] : memref<2x8x1xf32, #tpu.memory_space<vmem>>, vector<2x8x1xf32>
    tpu.vector_store %arg4[%c0_10, %c0_11, %c0_12], %25 {strides = array<i32>} : memref<2x8x1xf32, #tpu.memory_space<vmem>>, vector<2x8x1xf32>,
    %27 = vector.broadcast %25 : vector<2x8x1xf32> to vector<2x8x32xf32>
    %28 = arith.mulf %27, %11 : vector<2x8x32xf32>
    %cst_13 = arith.constant dense<0.000000e+00> : vector<2x32xf32>
    %29 = vector.multi_reduction <add>, %28, %cst_13 [1] : vector<2x8x32xf32> to vector<2x32xf32>
    %30 = vector.shape_cast %29 : vector<2x32xf32> to vector<2x1x32xf32>
    %c0_14 = arith.constant 0 : index
    %c0_15 = arith.constant 0 : index
    %c0_16 = arith.constant 0 : index
    %31 = vector.load %arg5[%c0_14, %c0_15, %c0_16] : memref<2x1x32xf32, #tpu.memory_space<vmem>>, vector<2x1x32xf32>
    tpu.vector_store %arg5[%c0_14, %c0_15, %c0_16], %30 {strides = array<i32>} : memref<2x1x32xf32, #tpu.memory_space<vmem>>, vector<2x1x32xf32>,
    return
  }
  func.func @transform_0(%arg0: i32) -> (i32, i32) {
    %c0_i32 = arith.constant 0 : i32
    %c0_i32_0 = arith.constant 0 : i32
    return %arg0, %c0_i32 : i32, i32
  }
  func.func @transform_1(%arg0: i32) -> (i32, i32) {
    %c0_i32 = arith.constant 0 : i32
    %c0_i32_0 = arith.constant 0 : i32
    %c0_i32_1 = arith.constant 0 : i32
    return %c0_i32, %c0_i32_0 : i32, i32
  }
  func.func @transform_2(%arg0: i32) -> (i32, i32) {
    %c0_i32 = arith.constant 0 : i32
    %c0_i32_0 = arith.constant 0 : i32
    %c0_i32_1 = arith.constant 0 : i32
    return %c0_i32, %c0_i32_0 : i32, i32
  }
  func.func @transform_3(%arg0: i32) -> (i32, i32, i32) {
    %c0_i32 = arith.constant 0 : i32
    %c0_i32_0 = arith.constant 0 : i32
    %c0_i32_1 = arith.constant 0 : i32
    return %arg0, %c0_i32, %c0_i32_0 : i32, i32, i32
  }
  func.func @transform_4(%arg0: i32) -> (i32, i32, i32) {
    %c0_i32 = arith.constant 0 : i32
    %c0_i32_0 = arith.constant 0 : i32
    %c0_i32_1 = arith.constant 0 : i32
    return %arg0, %c0_i32, %c0_i32_0 : i32, i32, i32
  }
  func.func @transform_5(%arg0: i32) -> (i32, i32) {
    %c0_i32 = arith.constant 0 : i32
    %c0_i32_0 = arith.constant 0 : i32
    return %arg0, %c0_i32 : i32, i32
  }
}

</mosaic_0001>

<llo_original>
// kernel: tpu_custom_call.1
$region0: #{tpu_custom_call.1}
  #allocation0 [shape = 'u32[]', space=smem, size = 0x4, offset = 0x4, fixed_abs, tag = 'smem constant byte address 0x4 - core index']
  #allocation1 [shape = 'u32[144,128]{1,0:T(1,128)}', space=vmem, size = 0x12000, scoped, tag = 'internal scratch']
  %s0 = inlined_call_operand.hbm [shape: f32[16,32], index: 0, kind: input, shape index: {}]
  %s1 = inlined_call_operand.hbm [shape: f32[32,64], index: 1, kind: input, shape index: {}]
  %s2 = inlined_call_operand.vmem [shape: f32[1,64], index: 2, kind: input, shape index: {}]
  %s3 = inlined_call_operand.vmem [shape: f32[2,8,1], index: 3, kind: output, shape index: {0}]
  %s4 = inlined_call_operand.hbm [shape: f32[2,1,32], index: 4, kind: output, shape index: {1}]
  %s5 = inlined_call_operand.hbm [shape: f32[16,32], index: 5, kind: output, shape index: {2}]
  %6 = xla_tuple %s3, %s4, %s5
  %s7 = sld [smem:[#allocation0]]
  $region46: #{tpu_custom_call.1} parent=0
    _
  %s9 = ssub.s32 1, %s7
  %s10 = scalar_select 0, %s9, %s7
  $region1: #{tpu_custom_call.1} parent=0
    #allocation2 [shape = 'u8[8192]{0}', space=vmem, size = 0x2000, scoped, tag = 'input window, operand 0, single buffered']
    #allocation3 [shape = 's32[1]{0}', space=sflag, size = 0x4, scoped, tag = 'scoped memory for tpu_custom_call.1']
    #allocation4 [shape = 's32[1]{0}', space=sflag, size = 0x4, scoped, tag = 'scoped memory for tpu_custom_call.1']
    #allocation5 [shape = 'u8[16384]{0}', space=vmem, size = 0x4000, scoped, tag = 'input window, operand 1, single buffered']
    #allocation6 [shape = 's32[1]{0}', space=sflag, size = 0x4, scoped, tag = 'scoped memory for tpu_custom_call.1']
    #allocation7 [shape = 'u8[1024]{0}', space=vmem, size = 0x400, scoped, tag = 'output window, operand 1, single buffered']
    #allocation8 [shape = 'u8[8192]{0}', space=vmem, size = 0x2000, scoped, tag = 'output window, operand 2, single buffered']
    #allocation9 [shape = 's32[1]{0}', space=sflag, size = 0x4, scoped, tag = 'scoped memory for tpu_custom_call.1']
    %11 = vsyncpa [#allocation3], 0
    %12 = vsyncpa [#allocation6], 0
    %13 = vsyncpa [#allocation4], 0
    %14 = vsyncpa [#allocation9], 0
    // Predicated region
    $region2: #{tpu_custom_call.1} parent=1 // pred_check
      _
    $region3: #{tpu_custom_call.1} parent=1 // pred_check_branch
      %16 = sbr.rel (0) target = $region5
    $region4: #{tpu_custom_call.1} parent=1 // pred_region
      %s18 = ssub.s32 256, 256
      %19 = vsyncadd [#allocation3], %s18
      %s20 = sshll.u32 [#allocation2], 4
      %s21 = int_to_ptr.vmem [resolvable:$true] %s20
      %26 = dma.hbm_to_vmem [thread:$0]  %s0, 256, %s21, [#allocation3], 128, 128, 8
    $region5: #{tpu_custom_call.1} parent=1 // pred_fallthru
      _
    // Predicated region
    $region6: #{tpu_custom_call.1} parent=1 // pred_check
      _
    $region7: #{tpu_custom_call.1} parent=1 // pred_check_branch
      %28 = sbr.rel (0) target = $region9
    $region8: #{tpu_custom_call.1} parent=1 // pred_region
      %s30 = ssub.s32 512, 512
      %31 = vsyncadd [#allocation6], %s30
      %s32 = sshll.u32 [#allocation5], 4
      %s33 = int_to_ptr.vmem [resolvable:$true] %s32
      %38 = dma.hbm_to_vmem [thread:$0]  %s1, 512, %s33, [#allocation6], 128, 128, 8
    $region9: #{tpu_custom_call.1} parent=1 // pred_fallthru
      _
    // Predicated region
    $region10: #{tpu_custom_call.1} parent=1 // pred_check
      _
    $region11: #{tpu_custom_call.1} parent=1 // pred_check_branch
      %40 = sbr.rel (0) target = $region13
    $region12: #{tpu_custom_call.1} parent=1 // pred_region
      _
    $region13: #{tpu_custom_call.1} parent=1 // pred_fallthru
      _
    // Predicated region
    $region14: #{tpu_custom_call.1} parent=1 // pred_check
      _
    $region15: #{tpu_custom_call.1} parent=1 // pred_check_branch
      %42 = sbr.rel (0) target = $region17
    $region16: #{tpu_custom_call.1} parent=1 // pred_region
      %43 = dma.done [#allocation3], 256
    $region17: #{tpu_custom_call.1} parent=1 // pred_fallthru
      _
    // Predicated region
    $region18: #{tpu_custom_call.1} parent=1 // pred_check
      _
    $region19: #{tpu_custom_call.1} parent=1 // pred_check_branch
      %45 = sbr.rel (0) target = $region21
    $region20: #{tpu_custom_call.1} parent=1 // pred_region
      %46 = dma.done [#allocation6], 512
    $region21: #{tpu_custom_call.1} parent=1 // pred_fallthru
      _
    %v47 = vld [vmem:[#allocation2] sm:$0xff]
    %v48 = vld [vmem:[#allocation2 + $0x8] sm:$0xff]
    %v49 = vld [vmem:[#allocation5] sm:$0xff]
    %v50 = vld [vmem:[#allocation5 + $0x8] sm:$0xff]
    %v51 = vld [vmem:[#allocation5 + $0x10] sm:$0xff]
    %v52 = vld [vmem:[#allocation5 + $0x18] sm:$0xff]
    %v53 = vld [vmem:[%s2] sm:$0x1]
    %v55 = vlaneseq
    %v56 = vshrl.u32 %v55, 7
    %v57 = vsub.s32 0, %v56
    %v58 = vrot.slane %v53, %v57
    %vm60 = vcmask 261120
    %v62 = vsel %vm60, %v47, 0
    %v65 = vsel %vm60, %v48, 0
    %67 = vmatprep.subr.mxu0 0.0
    %68 = vmatpush1.msra.mxu0 %v49
    %69 = vmatprep.subr.mxu0 0.0
    %70 = vmatpush1.msra.mxu0 %v50
    %71 = vmatprep.subr.mxu0 0.0
    %72 = vmatpush1.msra.mxu0 %v51
    %73 = vmatprep.subr.mxu0 0.0
    %74 = vmatpush1.msra.mxu0 %v52
    %75 = vmatprep.subr.mxu0 0.0
    %76 = vmatpush1.msra.mxu0 0.0
    %77 = vmatprep.subr.mxu0 0.0
    %78 = vmatpush1.msra.mxu0 0.0
    %79 = vmatprep.subr.mxu0 0.0
    %80 = vmatpush1.msra.mxu0 0.0
    %81 = vmatprep.subr.mxu0 0.0
    %82 = vmatpush1.msra.mxu0 0.0
    %83 = vmatprep.subr.mxu0 0.0
    %84 = vmatpush1.msra.mxu0 0.0
    %85 = vmatprep.subr.mxu0 0.0
    %86 = vmatpush1.msra.mxu0 0.0
    %87 = vmatprep.subr.mxu0 0.0
    %88 = vmatpush1.msra.mxu0 0.0
    %89 = vmatprep.subr.mxu0 0.0
    %90 = vmatpush1.msra.mxu0 0.0
    %91 = vmatprep.subr.mxu0 0.0
    %92 = vmatpush1.msra.mxu0 0.0
    %93 = vmatprep.subr.mxu0 0.0
    %94 = vmatpush1.msra.mxu0 0.0
    %95 = vmatprep.subr.mxu0 0.0
    %96 = vmatpush1.msra.mxu0 0.0
    %97 = vmatprep.subr.mxu0 0.0
    %98 = vmatpush1.msra.mxu0 0.0
    %99 = vmatprep.subr.mxu0 0.0
    %100 = vmatpush1.msra.mxu0 0.0
    %101 = vmatprep.subr.mxu0 0.0
    %102 = vmatpush1.msra.mxu0 0.0
    %103 = vmatprep.subr.mxu0 0.0
    %104 = vmatpush1.msra.mxu0 0.0
    %105 = vmatprep.subr.mxu0 0.0
    %106 = vmatpush1.msra.mxu0 0.0
    %107 = vmatprep.subr.mxu0 0.0
    %108 = vmatpush1.msra.mxu0 0.0
    %109 = vmatprep.subr.mxu0 0.0
    %110 = vmatpush1.msra.mxu0 0.0
    %111 = vmatprep.subr.mxu0 0.0
    %112 = vmatpush1.msra.mxu0 0.0
    %113 = vmatprep.subr.mxu0 0.0
    %114 = vmatpush1.msra.mxu0 0.0
    %115 = vmatprep.subr.mxu0 0.0
    %116 = vmatpush1.msra.mxu0 0.0
    %117 = vmatprep.subr.mxu0 0.0
    %118 = vmatpush1.msra.mxu0 0.0
    %119 = vmatprep.subr.mxu0 0.0
    %120 = vmatpush1.msra.mxu0 0.0
    %121 = vmatprep.subr.mxu0 0.0
    %122 = vmatpush1.msra.mxu0 0.0
    %123 = vmatprep.subr.mxu0 0.0
    %124 = vmatpush1.msra.mxu0 0.0
    %125 = vmatprep.subr.mxu0 0.0
    %126 = vmatpush1.msra.mxu0 0.0
    %127 = vmatprep.subr.mxu0 0.0
    %128 = vmatpush1.msra.mxu0 0.0
    %129 = vmatprep.subr.mxu0 0.0
    %130 = vmatpush1.msra.mxu0 0.0
    %131 = vmatprep.mubr.f32.mxu0 0.0
    %132 = vmatmul.mubr.f32.gmra.mrb[0].mxu0 %v62
    %v133 = vpop.f32.mrb[0].mxu0
    %v134 = vadd.f32 %v58, %v133
    %v135 = vpop.f32.mrb[0].mxu0
    %136 = vmatprep.mubr.f32.mxu0 0.0
    %137 = vmatmul.mubr.f32.gmra.mrb[0].mxu0 %v65
    %v138 = vpop.f32.mrb[0].mxu0
    %v139 = vadd.f32 %v58, %v138
    %v140 = vpop.f32.mrb[0].mxu0
    %141 = vdwg.mxu0
    %144 = vrot.lane.b32.xlu0 %v134, 96
    %v145 = vpop.permute.xlu0 %144
    %146 = vrot.lane.b32.xlu0 %v139, 96
    %v147 = vpop.permute.xlu0 %146
    %150 = vst.msk [vmem:[#allocation8] sm:$0xff] %vm60, %v145
    %151 = vst.msk [vmem:[#allocation8 + $0x8] sm:$0xff] %vm60, %v147
    %v152 = vlaneseq
    %v153 = vshrl.u32 %v152, 7
    %v154 = vsub.s32 0, %v153
    %v155 = vrot.slane %v134, %v154
    %v156 = vlaneseq
    %v157 = vshrl.u32 %v156, 7
    %v158 = vsub.s32 0, %v157
    %v159 = vrot.slane %v139, %v158
    %160 = vrot.lane.b32.xlu0 %v134, 112
    %v161 = vpop.permute.xlu0 %160
    %162 = vrot.lane.b32.xlu0 %v139, 112
    %v163 = vpop.permute.xlu0 %162
    %v166 = vmul.f32 %v155, %v161
    %v167 = vmul.f32 %v159, %v163
    %vm168 = vcmask 130048
    %v169 = vsel %vm168, %v166, 0.0
    %170 = vadd.xlane.f32.xlu0 %v169
    %v171 = vpop.xlane.xlu0 %170
    %v172 = vsel %vm168, %v167, 0.0
    %173 = vadd.xlane.f32.xlu0 %v172
    %v174 = vpop.xlane.xlu0 %173
    %v175 = vrot.slane %v171, 4
    %v176 = vmax.f32 %v171, %v175
    %v177 = vrot.slane %v176, 2
    %v178 = vmax.f32 %v176, %v177
    %v179 = vrot.slane %v178, 1
    %v180 = vmax.f32 %v178, %v179
    %v181 = vrot.slane %v174, 4
    %v182 = vmax.f32 %v174, %v181
    %v183 = vrot.slane %v182, 2
    %v184 = vmax.f32 %v182, %v183
    %v185 = vrot.slane %v184, 1
    %v186 = vmax.f32 %v184, %v185
    %v187 = vsub.f32 %v171, %v180
    %v188 = vsub.f32 %v174, %v186
    %v189 = vmul.f32 %v187, 1.442695
    %v190 = vpow.pop %v189
    %v191 = vmul.f32 %v188, 1.442695
    %v192 = vpow.pop %v191
    %v193 = vrot.slane %v190, 4
    %v194 = vadd.f32 %v190, %v193
    %v195 = vrot.slane %v194, 2
    %v196 = vadd.f32 %v194, %v195
    %v197 = vrot.slane %v196, 1
    %v198 = vadd.f32 %v196, %v197
    %v199 = vrot.slane %v192, 4
    %v200 = vadd.f32 %v192, %v199
    %v201 = vrot.slane %v200, 2
    %v202 = vadd.f32 %v200, %v201
    %v203 = vrot.slane %v202, 1
    %v204 = vadd.f32 %v202, %v203
    %v205 = vrcp.pop %v198
    %v206 = vrcp.pop %v204
    %v207 = vmul.f32 %v190, %v205
    %v208 = vmul.f32 %v192, %v206
    %vm209 = vcmask 7168
    %210 = vst.msk [vmem:[%s3] sm:$0xff] %vm209, %v207
    %211 = vst.msk [vmem:[%s3 + $0x8] sm:$0xff] %vm209, %v208
    %v212 = vmul.f32 %v207, %v134
    %v213 = vmul.f32 %v208, %v139
    %vm214 = vcmask 523520
    %v215 = vsel %vm214, %v212, 0.0
    %v216 = vrot.slane %v215, 4
    %v217 = vadd.f32 %v215, %v216
    %v218 = vrot.slane %v217, 2
    %v219 = vadd.f32 %v217, %v218
    %v220 = vrot.slane %v219, 1
    %v221 = vadd.f32 %v219, %v220
    %v222 = vsel %vm214, %v213, 0.0
    %v223 = vrot.slane %v222, 4
    %v224 = vadd.f32 %v222, %v223
    %v225 = vrot.slane %v224, 2
    %v226 = vadd.f32 %v224, %v225
    %v227 = vrot.slane %v226, 1
    %v228 = vadd.f32 %v226, %v227
    %231 = vrot.lane.b32.xlu0 %v221, 96
    %v232 = vpop.permute.xlu0 %231
    %233 = vrot.lane.b32.xlu0 %v228, 96
    %v234 = vpop.permute.xlu0 %233
    %vm237 = vcmask 253952
    %238 = vst.msk [vmem:[#allocation7] sm:$0x1] %vm237, %v232
    %239 = vst.msk [vmem:[#allocation7 + $0x1] sm:$0x1] %vm237, %v234
    // Predicated region
    $region22: #{tpu_custom_call.1} parent=1 // pred_check
      _
    $region23: #{tpu_custom_call.1} parent=1 // pred_check_branch
      %241 = sbr.rel (0) target = $region25
    $region24: #{tpu_custom_call.1} parent=1 // pred_region
      _
    $region25: #{tpu_custom_call.1} parent=1 // pred_fallthru
      _
    // Predicated region
    $region26: #{tpu_custom_call.1} parent=1 // pred_check
      _
    $region27: #{tpu_custom_call.1} parent=1 // pred_check_branch
      %243 = sbr.rel (0) target = $region29
    $region28: #{tpu_custom_call.1} parent=1 // pred_region
      %s245 = ssub.s32 32, 32
      %246 = vsyncadd [#allocation4], %s245
      %s247 = sshll.u32 [#allocation7], 4
      %s248 = int_to_ptr.vmem [resolvable:$true] %s247
      %253 = dma.vmem_to_hbm [thread:$0]  %s248, 32, %s4, [#allocation4], 16, 16, 1
    $region29: #{tpu_custom_call.1} parent=1 // pred_fallthru
      _
    // Predicated region
    $region30: #{tpu_custom_call.1} parent=1 // pred_check
      _
    $region31: #{tpu_custom_call.1} parent=1 // pred_check_branch
      %255 = sbr.rel (0) target = $region33
    $region32: #{tpu_custom_call.1} parent=1 // pred_region
      %s257 = ssub.s32 256, 256
      %258 = vsyncadd [#allocation9], %s257
      %s259 = sshll.u32 [#allocation8], 4
      %s260 = int_to_ptr.vmem [resolvable:$true] %s259
      %265 = dma.vmem_to_hbm [thread:$0]  %s260, 256, %s5, [#allocation9], 128, 128, 8
    $region33: #{tpu_custom_call.1} parent=1 // pred_fallthru
      _
    // Predicated region
    $region34: #{tpu_custom_call.1} parent=1 // pred_check
      _
    $region35: #{tpu_custom_call.1} parent=1 // pred_check_branch
      %267 = sbr.rel (0) target = $region37
    $region36: #{tpu_custom_call.1} parent=1 // pred_region
      _
    $region37: #{tpu_custom_call.1} parent=1 // pred_fallthru
      _
    // Predicated region
    $region38: #{tpu_custom_call.1} parent=1 // pred_check
      _
    $region39: #{tpu_custom_call.1} parent=1 // pred_check_branch
      %269 = sbr.rel (0) target = $region41
    $region40: #{tpu_custom_call.1} parent=1 // pred_region
      %270 = dma.done [#allocation4], 32
    $region41: #{tpu_custom_call.1} parent=1 // pred_fallthru
      _
    // Predicated region
    $region42: #{tpu_custom_call.1} parent=1 // pred_check
      _
    $region43: #{tpu_custom_call.1} parent=1 // pred_check_branch
      %272 = sbr.rel (0) target = $region45
    $region44: #{tpu_custom_call.1} parent=1 // pred_region
      %273 = dma.done [#allocation9], 256
    $region45: #{tpu_custom_call.1} parent=1 // pred_fallthru
      _
    %274 = vsyncpa [#allocation3], 1
    %275 = vsyncpa [#allocation6], 1
    %276 = vsyncpa [#allocation4], 1
    %277 = vsyncpa [#allocation9], 1

</llo_original>
